<compile_context>
chip_gen: v7x
topology: tpu7x:2x2x1
jax: 0.10.0
libtpu: 0.0.40
codegen_flags: <defaults>
</compile_context>

<pallas_src>
import functools

import jax
import jax.numpy as jnp
import numpy as np
from jax import lax
from jax.experimental import pallas as pl
from jax.experimental.pallas import tpu as pltpu


def _patch_merger_kernel(x_ref, q_ref, g_ref, b_ref, o_ref,
                         m_scr, l_scr, acc_scr, *,
                         scale, eps, n_tokens, tn, mxu_dtype, needs_mask):
    """Fused PatchMerger forward for one (batch, seq-tile) grid step.

    x_ref  : (1, TN, D)  input token tile (HBM dtype, e.g. bf16)
    q_ref  : (M, D)      learned queries
    g_ref  : (1, D)      LayerNorm gamma (f32)
    b_ref  : (1, D)      LayerNorm beta  (f32)
    o_ref  : (1, M, D)   output (resident across the seq-tile axis)
    m_scr  : (M, 1) f32  running row max      (online softmax)
    l_scr  : (M, 1) f32  running denominator  (online softmax)
    acc_scr: (M, D) f32  running numerator    (online softmax)
    """
    n_idx = pl.program_id(1)

    @pl.when(n_idx == 0)
    def _():
        m_scr[...] = jnp.full_like(m_scr, -jnp.inf)
        l_scr[...] = jnp.zeros_like(l_scr)
        acc_scr[...] = jnp.zeros_like(acc_scr)

    # --- LayerNorm over the feature (lane) axis, statistics in f32 ----------
    x = x_ref[0].astype(jnp.float32)                          # (TN, D)
    if needs_mask:
        # Zero padded tail rows so their LayerNorm stays finite (xn -> beta);
        # they are excluded from softmax below via sim = -inf.
        row = lax.broadcasted_iota(jnp.int32, (tn, 1), 0)
        row_valid = (n_idx * tn + row) < n_tokens             # (TN, 1)
        x = jnp.where(row_valid, x, 0.0)

    mean = jnp.mean(x, axis=-1, keepdims=True)
    xc = x - mean
    var = jnp.mean(xc * xc, axis=-1, keepdims=True)
    xn = xc * lax.rsqrt(var + eps) * g_ref[...] + b_ref[...]  # (TN, D) f32
    xn_mm = xn.astype(mxu_dtype)                              # MXU operand

    # --- sim = queries @ xn^T * scale   (MXU, f32 accumulation) ------------
    q = q_ref[...].astype(mxu_dtype)                          # (M, D)
    sim = lax.dot_general(q, xn_mm, (((1,), (1,)), ((), ())),
                          preferred_element_type=jnp.float32) * scale  # (M, TN)

    if needs_mask:
        col = lax.broadcasted_iota(jnp.int32, sim.shape, 1)
        col_valid = (n_idx * tn + col) < n_tokens
        sim = jnp.where(col_valid, sim, -jnp.inf)

    # --- online softmax accumulation over sequence tiles --------------------
    m_prev = m_scr[...]                                       # (M, 1)
    m_new = jnp.maximum(m_prev, jnp.max(sim, axis=-1, keepdims=True))
    alpha = jnp.exp(m_prev - m_new)                           # (M, 1)
    p = jnp.exp(sim - m_new)                                  # (M, TN)
    l_scr[...] = alpha * l_scr[...] + jnp.sum(p, axis=-1, keepdims=True)
    acc_scr[...] = alpha * acc_scr[...] + jnp.dot(
        p.astype(mxu_dtype), xn_mm, preferred_element_type=jnp.float32)  # (M, D)
    m_scr[...] = m_new

    @pl.when(n_idx == pl.num_programs(1) - 1)
    def _():
        inv_l = pl.reciprocal(l_scr[...], approx=True)        # EUP slot
        o_ref[0] = (acc_scr[...] * inv_l).astype(o_ref.dtype)


def _pick_seq_tile(n, d, x_itemsize, m, vmem_budget_bytes):
    """Largest sequence tile (multiple of 8, <= 2048) whose working set fits VMEM."""
    if n <= 8:
        return n                                  # tiny sequence: one full block
    candidates = {8, 16, 32, 64, 128, 256, 512, 1024, 2048}
    if n % 8 == 0 and n <= 2048:
        candidates.add(n)                         # exact fit avoids a masked tail

    def fits(t):
        need = (2 * t * d * x_itemsize            # double-buffered x tile (HBM dtype)
                + 4 * t * d * 4                   # f32 LayerNorm temporaries (xc, xn, ...)
                + 4 * m * t * 4                   # sim / p temporaries
                + 4 * m * d * 4)                  # accumulator scratch + output block
        return need <= vmem_budget_bytes

    best = 8
    for t in sorted(candidates):
        if t <= n and fits(t):
            best = t
    return best


def patch_merger_pallas(x, queries, gamma, beta, *, eps=1e-5, mxu_bf16=True,
                        vmem_budget_bytes=24 * 1024 * 1024):
    """PatchMerger forward. x: (B, N, D); queries: (M, D). Returns (B, M, D).

    Keep x / queries in bf16 in HBM for best performance (the kernel upcasts to
    f32 only for the LayerNorm statistics and accumulates matmuls in f32).
    """
    B, N, D = x.shape
    M = queries.shape[0]
    scale = float(D) ** -0.5
    tn = _pick_seq_tile(N, D, x.dtype.itemsize, M, vmem_budget_bytes)
    n_tiles = pl.cdiv(N, tn)
    needs_mask = (N % tn) != 0
    mxu_dtype = jnp.bfloat16 if mxu_bf16 else jnp.float32

    kernel = functools.partial(
        _patch_merger_kernel, scale=scale, eps=eps, n_tokens=N, tn=tn,
        mxu_dtype=mxu_dtype, needs_mask=needs_mask)

    g2 = gamma.reshape(1, D).astype(jnp.float32)
    b2 = beta.reshape(1, D).astype(jnp.float32)

    # Advisory cost hint for XLA's scheduler around the custom call.
    flops = 4 * B * M * N * D                     # two (M,D)x(D,N)-class matmuls
    transcendentals = B * (M * N + N)             # softmax exp + LayerNorm rsqrt
    bytes_accessed = (x.size * x.dtype.itemsize
                      + queries.size * queries.dtype.itemsize
                      + 2 * D * 4
                      + B * M * D * x.dtype.itemsize)

    return pl.pallas_call(
        kernel,
        out_shape=jax.ShapeDtypeStruct((B, M, D), x.dtype),
        grid_spec=pltpu.PrefetchScalarGridSpec(
            num_scalar_prefetch=0,
            grid=(B, n_tiles),
            in_specs=[
                pl.BlockSpec((1, tn, D), lambda b, n: (b, n, 0)),
                pl.BlockSpec((M, D), lambda b, n: (0, 0)),
                pl.BlockSpec((1, D), lambda b, n: (0, 0)),
                pl.BlockSpec((1, D), lambda b, n: (0, 0)),
            ],
            out_specs=pl.BlockSpec((1, M, D), lambda b, n: (b, 0, 0)),
            scratch_shapes=[
                pltpu.VMEM((M, 1), jnp.float32),   # running max
                pltpu.VMEM((M, 1), jnp.float32),   # running denominator
                pltpu.VMEM((M, D), jnp.float32),   # running numerator
            ],
        ),
        compiler_params=pltpu.CompilerParams(
            dimension_semantics=("parallel", "arbitrary"),
            vmem_limit_bytes=32 * 1024 * 1024),
        cost_estimate=pl.CostEstimate(
            flops=flops,
            transcendentals=transcendentals,
            bytes_accessed=bytes_accessed),
    )(x, queries, g2, b2)


def patch_merger_reference(x, queries, gamma, beta, *, eps=1e-5):
    """Pure-JAX reference matching torch's PatchMerger forward."""
    x = x.astype(jnp.float32)
    mean = jnp.mean(x, axis=-1, keepdims=True)
    var = jnp.mean((x - mean) ** 2, axis=-1, keepdims=True)
    xn = (x - mean) / jnp.sqrt(var + eps) * gamma + beta
    scale = x.shape[-1] ** -0.5
    sim = jnp.einsum("md,bnd->bmn", queries.astype(jnp.float32), xn) * scale
    attn = jax.nn.softmax(sim, axis=-1)
    return jnp.einsum("bmn,bnd->bmd", attn, xn)


if __name__ == "__main__":
    # Small shapes consistent with PatchMerger: x (B, tokens, dim), queries (M, dim).
    B, N, D, M = 2, 256, 128, 16     # D=128 -> lane-dense; N=256 -> single seq tile

    key = jax.random.PRNGKey(0)
    k_x, k_q, k_g, k_b = jax.random.split(key, 4)

    x = jax.random.normal(k_x, (B, N, D), dtype=jnp.float32)
    queries = jax.random.normal(k_q, (M, D), dtype=jnp.float32)
    gamma = 1.0 + 0.1 * jax.random.normal(k_g, (D,), dtype=jnp.float32)
    beta = 0.1 * jax.random.normal(k_b, (D,), dtype=jnp.float32)

    # 1) f32 inputs, f32 MXU operands: tight numerical check.
    out = patch_merger_pallas(x, queries, gamma, beta, mxu_bf16=False)
    jax.block_until_ready(out)
    ref = patch_merger_reference(x, queries, gamma, beta)
    np.testing.assert_allclose(np.asarray(out), np.asarray(ref),
                               rtol=5e-3, atol=5e-3)

    # 2) Ragged sequence length (exercises the cdiv grid + masked-tail path).
    N2 = 150
    x2 = jax.random.normal(k_x, (B, N2, D), dtype=jnp.float32)
    out2 = patch_merger_pallas(x2, queries, gamma, beta, mxu_bf16=False)
    jax.block_until_ready(out2)
    ref2 = patch_merger_reference(x2, queries, gamma, beta)
    np.testing.assert_allclose(np.asarray(out2), np.asarray(ref2),
                               rtol=5e-3, atol=5e-3)

    # 3) Production config: bf16 HBM traffic + bf16 MXU operands, f32 accumulation.
    xb = x.astype(jnp.bfloat16)
    qb = queries.astype(jnp.bfloat16)
    out_bf = patch_merger_pallas(xb, qb, gamma, beta)   # mxu_bf16=True (default)
    jax.block_until_ready(out_bf)
    ref_bf = patch_merger_reference(xb.astype(jnp.float32),
                                    qb.astype(jnp.float32), gamma, beta)
    np.testing.assert_allclose(np.asarray(out_bf.astype(jnp.float32)),
                               np.asarray(ref_bf), rtol=3e-2, atol=3e-2)

    print("KERNEL_OK")
</pallas_src>

<mosaic_0001>
module attributes {stable_mosaic.version = 11 : i64} {
  func.func @_patch_merger_kernel(%arg0: i32, %arg1: i32, %arg2: memref<1x256x128xf32, #tpu.memory_space<vmem>>, %arg3: memref<16x128xf32, #tpu.memory_space<vmem>>, %arg4: memref<1x128xf32, #tpu.memory_space<vmem>>, %arg5: memref<1x128xf32, #tpu.memory_space<vmem>>, %arg6: memref<1x16x128xf32, #tpu.memory_space<vmem>>, %arg7: memref<16x1xf32, #tpu.memory_space<vmem>>, %arg8: memref<16x1xf32, #tpu.memory_space<vmem>>, %arg9: memref<16x128xf32, #tpu.memory_space<vmem>>) attributes {dimension_semantics = [#tpu.dimension_semantics<parallel>, #tpu.dimension_semantics<arbitrary>], iteration_bounds = array<i64: 2, 1>, scalar_prefetch = 0 : i64, scratch_operands = 3 : i64, tpu.core_type = #tpu.core_type<tc>, window_params = [{transform_indices = @transform_0, window_bounds = array<i64: 1, 256, 128>}, {pipeline_mode = #tpu.pipeline_mode<synchronous>, transform_indices = @transform_1, window_bounds = array<i64: 16, 128>}, {pipeline_mode = #tpu.pipeline_mode<synchronous>, transform_indices = @transform_2, window_bounds = array<i64: 1, 128>}, {pipeline_mode = #tpu.pipeline_mode<synchronous>, transform_indices = @transform_3, window_bounds = array<i64: 1, 128>}, {transform_indices = @transform_4, window_bounds = array<i64: 1, 16, 128>}]} {
    %c0_i32 = arith.constant 0 : i32
    %0 = arith.cmpi eq, %arg1, %c0_i32 : i32
    %1 = arith.extui %0 : i1 to i32
    %c0_i32_0 = arith.constant 0 : i32
    %2 = arith.cmpi ne, %1, %c0_i32_0 : i32
    scf.if %2 {
      %cst_32 = arith.constant 0xFF800000 : f32
      %56 = vector.broadcast %cst_32 : f32 to vector<16x1xf32>
      %c0_33 = arith.constant 0 : index
      %c0_34 = arith.constant 0 : index
      %57 = vector.load %arg7[%c0_33, %c0_34] : memref<16x1xf32, #tpu.memory_space<vmem>>, vector<16x1xf32>
      tpu.vector_store %arg7[%c0_33, %c0_34], %56 {strides = array<i32>} : memref<16x1xf32, #tpu.memory_space<vmem>>, vector<16x1xf32>,
      %cst_35 = arith.constant 0.000000e+00 : f32
      %58 = vector.broadcast %cst_35 : f32 to vector<16x1xf32>
      %c0_36 = arith.constant 0 : index
      %c0_37 = arith.constant 0 : index
      %59 = vector.load %arg8[%c0_36, %c0_37] : memref<16x1xf32, #tpu.memory_space<vmem>>, vector<16x1xf32>
      tpu.vector_store %arg8[%c0_36, %c0_37], %58 {strides = array<i32>} : memref<16x1xf32, #tpu.memory_space<vmem>>, vector<16x1xf32>,
      %cst_38 = arith.constant 0.000000e+00 : f32
      %60 = vector.broadcast %cst_38 : f32 to vector<16x128xf32>
      %c0_39 = arith.constant 0 : index
      %c0_40 = arith.constant 0 : index
      %61 = vector.load %arg9[%c0_39, %c0_40] : memref<16x128xf32, #tpu.memory_space<vmem>>, vector<16x128xf32>
      tpu.vector_store %arg9[%c0_39, %c0_40], %60 {strides = array<i32>} : memref<16x128xf32, #tpu.memory_space<vmem>>, vector<16x128xf32>,
    } else {
    }
    %c0 = arith.constant 0 : index
    %c0_1 = arith.constant 0 : index
    %c0_2 = arith.constant 0 : index
    %3 = vector.load %arg2[%c0, %c0_1, %c0_2] : memref<1x256x128xf32, #tpu.memory_space<vmem>>, vector<1x256x128xf32>
    %4 = vector.shape_cast %3 : vector<1x256x128xf32> to vector<256x128xf32>
    %cst = arith.constant dense<0.000000e+00> : vector<256xf32>
    %5 = vector.multi_reduction <add>, %4, %cst [1] : vector<256x128xf32> to vector<256xf32>
    %6 = vector.shape_cast %5 : vector<256xf32> to vector<256x1xf32>
    %cst_3 = arith.constant 1.280000e+02 : f32
    %7 = vector.broadcast %cst_3 : f32 to vector<256x1xf32>
    %8 = arith.divf %6, %7 : vector<256x1xf32>
    %9 = vector.broadcast %8 : vector<256x1xf32> to vector<256x128xf32>
    %10 = arith.subf %4, %9 : vector<256x128xf32>
    %11 = arith.mulf %10, %10 : vector<256x128xf32>
    %cst_4 = arith.constant dense<0.000000e+00> : vector<256xf32>
    %12 = vector.multi_reduction <add>, %11, %cst_4 [1] : vector<256x128xf32> to vector<256xf32>
    %13 = vector.shape_cast %12 : vector<256xf32> to vector<256x1xf32>
    %cst_5 = arith.constant 1.280000e+02 : f32
    %14 = vector.broadcast %cst_5 : f32 to vector<256x1xf32>
    %15 = arith.divf %13, %14 : vector<256x1xf32>
    %cst_6 = arith.constant 9.99999974E-6 : f32
    %16 = vector.broadcast %cst_6 : f32 to vector<256x1xf32>
    %17 = arith.addf %15, %16 : vector<256x1xf32>
    %18 = math.rsqrt %17 : vector<256x1xf32>
    %19 = vector.broadcast %18 : vector<256x1xf32> to vector<256x128xf32>
    %20 = arith.mulf %10, %19 : vector<256x128xf32>
    %c0_7 = arith.constant 0 : index
    %c0_8 = arith.constant 0 : index
    %21 = vector.load %arg4[%c0_7, %c0_8] : memref<1x128xf32, #tpu.memory_space<vmem>>, vector<1x128xf32>
    %22 = vector.broadcast %21 : vector<1x128xf32> to vector<256x128xf32>
    %23 = arith.mulf %20, %22 : vector<256x128xf32>
    %c0_9 = arith.constant 0 : index
    %c0_10 = arith.constant 0 : index
    %24 = vector.load %arg5[%c0_9, %c0_10] : memref<1x128xf32, #tpu.memory_space<vmem>>, vector<1x128xf32>
    %25 = vector.broadcast %24 : vector<1x128xf32> to vector<256x128xf32>
    %26 = arith.addf %23, %25 : vector<256x128xf32>
    %c0_11 = arith.constant 0 : index
    %c0_12 = arith.constant 0 : index
    %27 = vector.load %arg3[%c0_11, %c0_12] : memref<16x128xf32, #tpu.memory_space<vmem>>, vector<16x128xf32>
    %cst_13 = arith.constant dense<0.000000e+00> : vector<16x256xf32>
    %28 = tpu.matmul %27, %26, %cst_13 {dimension_numbers = #tpu.dot_dimension_numbers<[1], [1], [0], [0], [0, 0, 1, 0], [], []>} : vector<16x128xf32>, vector<256x128xf32>, vector<16x256xf32> -> vector<16x256xf32>
    %cst_14 = arith.constant 0.0883883461 : f32
    %29 = vector.broadcast %cst_14 : f32 to vector<16x256xf32>
    %30 = arith.mulf %28, %29 : vector<16x256xf32>
    %c0_15 = arith.constant 0 : index
    %c0_16 = arith.constant 0 : index
    %31 = vector.load %arg7[%c0_15, %c0_16] : memref<16x1xf32, #tpu.memory_space<vmem>>, vector<16x1xf32>
    %cst_17 = arith.constant dense<0xFF800000> : vector<16xf32>
    %32 = vector.multi_reduction <maximumf>, %30, %cst_17 [1] : vector<16x256xf32> to vector<16xf32>
    %33 = vector.shape_cast %32 : vector<16xf32> to vector<16x1xf32>
    %34 = arith.maximumf %31, %33 : vector<16x1xf32>
    %35 = arith.subf %31, %34 : vector<16x1xf32>
    %36 = math.exp %35 : vector<16x1xf32>
    %37 = vector.broadcast %34 : vector<16x1xf32> to vector<16x256xf32>
    %38 = arith.subf %30, %37 : vector<16x256xf32>
    %39 = math.exp %38 : vector<16x256xf32>
    %c0_18 = arith.constant 0 : index
    %c0_19 = arith.constant 0 : index
    %40 = vector.load %arg8[%c0_18, %c0_19] : memref<16x1xf32, #tpu.memory_space<vmem>>, vector<16x1xf32>
    %41 = arith.mulf %36, %40 : vector<16x1xf32>
    %cst_20 = arith.constant dense<0.000000e+00> : vector<16xf32>
    %42 = vector.multi_reduction <add>, %39, %cst_20 [1] : vector<16x256xf32> to vector<16xf32>
    %43 = vector.shape_cast %42 : vector<16xf32> to vector<16x1xf32>
    %44 = arith.addf %41, %43 : vector<16x1xf32>
    %c0_21 = arith.constant 0 : index
    %c0_22 = arith.constant 0 : index
    %45 = vector.load %arg8[%c0_21, %c0_22] : memref<16x1xf32, #tpu.memory_space<vmem>>, vector<16x1xf32>
    tpu.vector_store %arg8[%c0_21, %c0_22], %44 {strides = array<i32>} : memref<16x1xf32, #tpu.memory_space<vmem>>, vector<16x1xf32>,
    %c0_23 = arith.constant 0 : index
    %c0_24 = arith.constant 0 : index
    %46 = vector.load %arg9[%c0_23, %c0_24] : memref<16x128xf32, #tpu.memory_space<vmem>>, vector<16x128xf32>
    %47 = vector.broadcast %36 : vector<16x1xf32> to vector<16x128xf32>
    %48 = arith.mulf %47, %46 : vector<16x128xf32>
    %cst_25 = arith.constant dense<0.000000e+00> : vector<16x128xf32>
    %49 = tpu.matmul %39, %26, %cst_25 {dimension_numbers = #tpu.dot_dimension_numbers<[1], [0], [0], [1], [0, 0, 1, 1], [], []>} : vector<16x256xf32>, vector<256x128xf32>, vector<16x128xf32> -> vector<16x128xf32>
    %50 = arith.addf %48, %49 : vector<16x128xf32>
    %c0_26 = arith.constant 0 : index
    %c0_27 = arith.constant 0 : index
    %51 = vector.load %arg9[%c0_26, %c0_27] : memref<16x128xf32, #tpu.memory_space<vmem>>, vector<16x128xf32>
    tpu.vector_store %arg9[%c0_26, %c0_27], %50 {strides = array<i32>} : memref<16x128xf32, #tpu.memory_space<vmem>>, vector<16x128xf32>,
    %c0_28 = arith.constant 0 : index
    %c0_29 = arith.constant 0 : index
    %52 = vector.load %arg7[%c0_28, %c0_29] : memref<16x1xf32, #tpu.memory_space<vmem>>, vector<16x1xf32>
    tpu.vector_store %arg7[%c0_28, %c0_29], %34 {strides = array<i32>} : memref<16x1xf32, #tpu.memory_space<vmem>>, vector<16x1xf32>,
    %c0_i32_30 = arith.constant 0 : i32
    %53 = arith.cmpi eq, %arg1, %c0_i32_30 : i32
    %54 = arith.extui %53 : i1 to i32
    %c0_i32_31 = arith.constant 0 : i32
    %55 = arith.cmpi ne, %54, %c0_i32_31 : i32
    scf.if %55 {
      %c0_32 = arith.constant 0 : index
      %c0_33 = arith.constant 0 : index
      %56 = vector.load %arg8[%c0_32, %c0_33] : memref<16x1xf32, #tpu.memory_space<vmem>>, vector<16x1xf32>
      %57 = tpu.reciprocal %56 {approx = true} : vector<16x1xf32> -> vector<16x1xf32>
      %c0_34 = arith.constant 0 : index
      %c0_35 = arith.constant 0 : index
      %58 = vector.load %arg9[%c0_34, %c0_35] : memref<16x128xf32, #tpu.memory_space<vmem>>, vector<16x128xf32>
      %59 = vector.broadcast %57 : vector<16x1xf32> to vector<16x128xf32>
      %60 = arith.mulf %58, %59 : vector<16x128xf32>
      %c0_36 = arith.constant 0 : index
      %c0_37 = arith.constant 0 : index
      %c0_38 = arith.constant 0 : index
      %61 = vector.load %arg6[%c0_36, %c0_37, %c0_38] : memref<1x16x128xf32, #tpu.memory_space<vmem>>, vector<1x16x128xf32>
      %62 = vector.shape_cast %61 : vector<1x16x128xf32> to vector<16x128xf32>
      %63 = vector.shape_cast %60 : vector<16x128xf32> to vector<1x16x128xf32>
      tpu.vector_store %arg6[%c0_36, %c0_37, %c0_38], %63 {strides = array<i32>} : memref<1x16x128xf32, #tpu.memory_space<vmem>>, vector<1x16x128xf32>,
    } else {
    }
    return
  }
  func.func @transform_0(%arg0: i32, %arg1: i32) -> (i32, i32, i32) {
    %c0_i32 = arith.constant 0 : i32
    %c0_i32_0 = arith.constant 0 : i32
    return %arg0, %arg1, %c0_i32 : i32, i32, i32
  }
  func.func @transform_1(%arg0: i32, %arg1: i32) -> (i32, i32) {
    %c0_i32 = arith.constant 0 : i32
    %c0_i32_0 = arith.constant 0 : i32
    %c0_i32_1 = arith.constant 0 : i32
    return %c0_i32, %c0_i32_0 : i32, i32
  }
  func.func @transform_2(%arg0: i32, %arg1: i32) -> (i32, i32) {
    %c0_i32 = arith.constant 0 : i32
    %c0_i32_0 = arith.constant 0 : i32
    %c0_i32_1 = arith.constant 0 : i32
    return %c0_i32, %c0_i32_0 : i32, i32
  }
  func.func @transform_3(%arg0: i32, %arg1: i32) -> (i32, i32) {
    %c0_i32 = arith.constant 0 : i32
    %c0_i32_0 = arith.constant 0 : i32
    %c0_i32_1 = arith.constant 0 : i32
    return %c0_i32, %c0_i32_0 : i32, i32
  }
  func.func @transform_4(%arg0: i32, %arg1: i32) -> (i32, i32, i32) {
    %c0_i32 = arith.constant 0 : i32
    %c0_i32_0 = arith.constant 0 : i32
    %c0_i32_1 = arith.constant 0 : i32
    return %arg0, %c0_i32, %c0_i32_0 : i32, i32, i32
  }
}

</mosaic_0001>

<llo_original>
// kernel: tpu_custom_call.1
$region0: #{tpu_custom_call.1}
  #allocation0 [shape = 'u32[]', space=smem, size = 0x4, offset = 0x4, fixed_abs, tag = 'smem constant byte address 0x4 - core index']
  #allocation1 [shape = 'u32[144,128]{1,0:T(1,128)}', space=vmem, size = 0x12000, scoped, tag = 'internal scratch']
  #allocation2 [shape = 'f32[16,1]{1,0:T(8,128)}', space=vmem, size = 0x2000, scoped, tag = 'scratch operand']
  #allocation3 [shape = 'f32[16,1]{1,0:T(8,128)}', space=vmem, size = 0x2000, scoped, tag = 'scratch operand']
  #allocation4 [shape = 'f32[16,128]{1,0:T(8,128)}', space=vmem, size = 0x2000, scoped, tag = 'scratch operand']
  %s0 = inlined_call_operand.hbm [shape: f32[2,256,128], index: 0, kind: input, shape index: {}]
  %s1 = inlined_call_operand.hbm [shape: f32[16,128], index: 1, kind: input, shape index: {}]
  %s2 = inlined_call_operand.vmem [shape: f32[1,128], index: 2, kind: input, shape index: {}]
  %s3 = inlined_call_operand.vmem [shape: f32[1,128], index: 3, kind: input, shape index: {}]
  %s4 = inlined_call_operand.hbm [shape: f32[2,16,128], index: 4, kind: output, shape index: {}]
  %s5 = sld [smem:[#allocation0]]
  $region65: #{tpu_custom_call.1} parent=0
    _
  %s7 = ssub.s32 1, %s5
  %s8 = scalar_select 0, %s7, %s5
  $region1: #{tpu_custom_call.1} parent=0
    #allocation5 [shape = 'u8[262144]{0}', space=vmem, size = 0x40000, scoped, tag = 'input window, operand 0']
    #allocation6 [shape = 's32[2]{0}', space=sflag, size = 0x8, scoped, tag = 'scoped memory for tpu_custom_call.1']
    #allocation7 [shape = 's32[2]{0}', space=sflag, size = 0x8, scoped, tag = 'scoped memory for tpu_custom_call.1']
    #allocation8 [shape = 'u8[8192]{0}', space=vmem, size = 0x2000, scoped, tag = 'input window, operand 1, single buffered']
    #allocation9 [shape = 's32[1]{0}', space=sflag, size = 0x4, scoped, tag = 'scoped memory for tpu_custom_call.1']
    #allocation10 [shape = 'u8[16384]{0}', space=vmem, size = 0x4000, scoped, tag = 'output window, operand 0']
    %9 = vsyncpa [#allocation6], 0
    %s10 = scalar_lea.sflag [#allocation6], 1
    %11 = vsyncpa %s10, 0
    %12 = vsyncpa [#allocation9], 0
    %13 = vsyncpa [#allocation7], 0
    %s14 = scalar_lea.sflag [#allocation7], 1
    %15 = vsyncpa %s14, 0
    loop: start=0, step=1, limit=4
    $region2: #{tpu_custom_call.1} parent=1 // loop_pre_header
      _
    $region3: #{tpu_custom_call.1} parent=1 // loop_header
      %s17 = sphi 0, %s21
      %p18 = scmp.ge.s32.totalorder %s17, 4
      %s24 = sphi 0, %s36
      %s25 = sphi 0, %s32
      %s26 = sphi 0, %s24
      %s27 = sphi 0, %s25
      %s28 = sphi 0, %s26
      %s29 = sphi 0, %s27
      %s41 = sphi 0, %s43
      %s44 = sphi 0, %s41
      %s45 = sphi 0, %s44
      %s61 = sphi 0, %s45
      %s65 = sphi 0, %s65
      %s67 = sphi 0, %s65
      %s68 = sphi 0, %s67
      %s82 = sphi 0, %s68
      %s86 = sphi 0, %s86
      %s88 = sphi 0, %s86
      %s89 = sphi 0, %s88
      %s103 = sphi 0, %s89
      %s107 = sphi 0, %s107
      %s109 = sphi 0, %s107
      %s110 = sphi 0, %s109
      %s124 = sphi 0, %s110
      %s130 = sphi 0, %s132
      %s133 = sphi 0, %s130
      %s134 = sphi 0, %s133
      %s150 = sphi 0, %s134
    $region4: #{tpu_custom_call.1} parent=1 // loop_header_branch
      %20 = sbr.rel (%p18) target = $region8
    $region5: #{tpu_custom_call.1} parent=1 // loop_body
      %s22 = ssub.s32 %s17, 1
      %s23 = ssub.s32 %s17, 2
      %s30 = sadd.s32 1, %s25
      %p31 = scmp.ge.s32.totalorder %s30, 1
      %s32 = scalar_select %p31, 0, %s30
      %s33 = sadd.s32 1, %s24
      %s34 = scalar_select %p31, %s33, %s24
      %p35 = scmp.ge.s32.totalorder %s34, 2
      %s36 = scalar_select %p35, 0, %s34
      %s37 = ssub.s32 %s24, %s36
      %s38 = ssub.s32 %s25, %s32
      %s39 = sor.u32 %s37, %s38
      %p40 = scmp.eq.s32.totalorder %s39, 0
      %s42 = sadd.s32 %s41, 1
      %s43 = scalar_select %p40, %s41, %s42
      %p46 = pneg %p40
      %p47 = scmp.eq.s32.totalorder %s17, 1
      %p48 = por %p46, %p47
      %p49 = scmp.ne.s32.totalorder %s41, %s44
      %p50 = scmp.eq.s32.totalorder %s17, 0
      %p51 = por %p49, %p50
      %p52 = scmp.ne.s32.totalorder %s41, %s44
      %p53 = scmp.eq.s32.totalorder %s22, 1
      %p54 = por %p52, %p53
      %p55 = scmp.ne.s32.totalorder %s44, %s45
      %p56 = scmp.eq.s32.totalorder %s22, 0
      %p57 = por %p55, %p56
      %p58 = scmp.ne.s32.totalorder %s44, %s45
      %p59 = scmp.eq.s32.totalorder %s23, 1
      %p60 = por %p58, %p59
      %p62 = scmp.ne.s32.totalorder %s45, %s61
      %p63 = scmp.eq.s32.totalorder %s23, 0
      %p64 = por %p62, %p63
      %s66 = sadd.s32 %s65, 1
      %p69 = scmp.eq.s32.totalorder %s17, 1
      %p70 = scmp.ne.s32.totalorder %s65, %s67
      %p71 = scmp.eq.s32.totalorder %s17, 0
      %p72 = por %p70, %p71
      %p73 = scmp.ne.s32.totalorder %s65, %s67
      %p74 = scmp.eq.s32.totalorder %s22, 1
      %p75 = por %p73, %p74
      %p76 = scmp.ne.s32.totalorder %s67, %s68
      %p77 = scmp.eq.s32.totalorder %s22, 0
      %p78 = por %p76, %p77
      %p79 = scmp.ne.s32.totalorder %s67, %s68
      %p80 = scmp.eq.s32.totalorder %s23, 1
      %p81 = por %p79, %p80
      %p83 = scmp.ne.s32.totalorder %s68, %s82
      %p84 = scmp.eq.s32.totalorder %s23, 0
      %p85 = por %p83, %p84
      %s87 = sadd.s32 %s86, 1
      %p90 = scmp.eq.s32.totalorder %s17, 1
      %p91 = scmp.ne.s32.totalorder %s86, %s88
      %p92 = scmp.eq.s32.totalorder %s17, 0
      %p93 = por %p91, %p92
      %p94 = scmp.ne.s32.totalorder %s86, %s88
      %p95 = scmp.eq.s32.totalorder %s22, 1
      %p96 = por %p94, %p95
      %p97 = scmp.ne.s32.totalorder %s88, %s89
      %p98 = scmp.eq.s32.totalorder %s22, 0
      %p99 = por %p97, %p98
      %p100 = scmp.ne.s32.totalorder %s88, %s89
      %p101 = scmp.eq.s32.totalorder %s23, 1
      %p102 = por %p100, %p101
      %p104 = scmp.ne.s32.totalorder %s89, %s103
      %p105 = scmp.eq.s32.totalorder %s23, 0
      %p106 = por %p104, %p105
      %s108 = sadd.s32 %s107, 1
      %p111 = scmp.eq.s32.totalorder %s17, 1
      %p112 = scmp.ne.s32.totalorder %s107, %s109
      %p113 = scmp.eq.s32.totalorder %s17, 0
      %p114 = por %p112, %p113
      %p115 = scmp.ne.s32.totalorder %s107, %s109
      %p116 = scmp.eq.s32.totalorder %s22, 1
      %p117 = por %p115, %p116
      %p118 = scmp.ne.s32.totalorder %s109, %s110
      %p119 = scmp.eq.s32.totalorder %s22, 0
      %p120 = por %p118, %p119
      %p121 = scmp.ne.s32.totalorder %s109, %s110
      %p122 = scmp.eq.s32.totalorder %s23, 1
      %p123 = por %p121, %p122
      %p125 = scmp.ne.s32.totalorder %s110, %s124
      %p126 = scmp.eq.s32.totalorder %s23, 0
      %p127 = por %p125, %p126
      %s128 = ssub.s32 %s24, %s36
      %p129 = scmp.eq.s32.totalorder %s128, 0
      %s131 = sadd.s32 %s130, 1
      %s132 = scalar_select %p129, %s130, %s131
      %p135 = pneg %p129
      %p136 = scmp.eq.s32.totalorder %s17, 1
      %p137 = por %p135, %p136
      %p138 = scmp.ne.s32.totalorder %s130, %s133
      %p139 = scmp.eq.s32.totalorder %s17, 0
      %p140 = por %p138, %p139
      %p141 = scmp.ne.s32.totalorder %s130, %s133
      %p142 = scmp.eq.s32.totalorder %s22, 1
      %p143 = por %p141, %p142
      %p144 = scmp.ne.s32.totalorder %s133, %s134
      %p145 = scmp.eq.s32.totalorder %s22, 0
      %p146 = por %p144, %p145
      %p147 = scmp.ne.s32.totalorder %s133, %s134
      %p148 = scmp.eq.s32.totalorder %s23, 1
      %p149 = por %p147, %p148
      %p151 = scmp.ne.s32.totalorder %s134, %s150
      %p152 = scmp.eq.s32.totalorder %s23, 0
      %p153 = por %p151, %p152
      %p154 = scmp.le.s32.totalorder 1, %s17
      %p155 = scmp.lt.s32.totalorder %s17, 3
      %p156 = pnand %p154, %p155
      %p157 = pneg %p156
      // Predicated region
      $region9: #{tpu_custom_call.1} parent=5 // pred_check
        _
      $region10: #{tpu_custom_call.1} parent=5 // pred_check_branch
        %159 = sbr.rel (%p156) target = $region12
      $region11: #{tpu_custom_call.1} parent=5 // pred_region
        %s160 = ssub.s32 %s17, 1
        // Predicated region
        $region13: #{tpu_custom_call.1} parent=11 // pred_check
          %p161 = pneg %p78
        $region14: #{tpu_custom_call.1} parent=11 // pred_check_branch
          %163 = sbr.rel (%p161) target = $region16
        $region15: #{tpu_custom_call.1} parent=11 // pred_region
          %s165 = ssub.s32 256, 256
          %166 = vsyncadd [#allocation9], %s165
          %s167 = sshll.u32 [#allocation8], 4
          %s168 = int_to_ptr.vmem [resolvable:$true] %s167
          %173 = dma.hbm_to_vmem [thread:$0]  %s1, 256, %s168, [#allocation9], 128, 128, 8
        $region16: #{tpu_custom_call.1} parent=11 // pred_fallthru
          _
        // Predicated region
        $region17: #{tpu_custom_call.1} parent=11 // pred_check
          %p174 = pneg %p99
        $region18: #{tpu_custom_call.1} parent=11 // pred_check_branch
          %176 = sbr.rel (%p174) target = $region20
        $region19: #{tpu_custom_call.1} parent=11 // pred_region
          _
        $region20: #{tpu_custom_call.1} parent=11 // pred_fallthru
          _
        // Predicated region
        $region21: #{tpu_custom_call.1} parent=11 // pred_check
          %p177 = pneg %p120
        $region22: #{tpu_custom_call.1} parent=11 // pred_check_branch
          %179 = sbr.rel (%p177) target = $region24
        $region23: #{tpu_custom_call.1} parent=11 // pred_region
          _
        $region24: #{tpu_custom_call.1} parent=11 // pred_fallthru
          _
      $region12: #{tpu_custom_call.1} parent=5 // pred_fallthru
        _
      %p180 = scmp.lt.s32.totalorder %s17, 2
      // Predicated region
      $region25: #{tpu_custom_call.1} parent=5 // pred_check
        %p181 = pneg %p180
      $region26: #{tpu_custom_call.1} parent=5 // pred_check_branch
        %183 = sbr.rel (%p181) target = $region28
      $region27: #{tpu_custom_call.1} parent=5 // pred_region
        // Predicated region
        $region29: #{tpu_custom_call.1} parent=27 // pred_check
          %p184 = pneg %p51
        $region30: #{tpu_custom_call.1} parent=27 // pred_check_branch
          %186 = sbr.rel (%p184) target = $region32
        $region31: #{tpu_custom_call.1} parent=27 // pred_region
          %s187 = sand.u32 %s41, 1
          %s188 = scalar_lea.sflag [#allocation6], %s187
          %s189 = sand.u32 %s41, 1
          %s190 = smul.addr %s189, 256
          %s191 = scalar_lea.vmem [#allocation5], %s190
          %s192 = smul.u32 32, %s25
          %s194 = ssub.s32 4096, 4096
          %195 = vsyncadd %s188, %s194
          %s196 = smul.addr %s24, 32
          %s197 = sadd.s32 %s192, %s196
          %s198 = smul.addr %s197, 128
          %s199 = scalar_lea.hbm %s0, %s198
          %s200 = sshll.u32 %s191, 4
          %s201 = int_to_ptr.vmem [resolvable:$true] %s200
          %206 = dma.hbm_to_vmem [thread:$0]  %s199, 4096, %s201, %s188, 128, 128, 8
        $region32: #{tpu_custom_call.1} parent=27 // pred_fallthru
          _
      $region28: #{tpu_custom_call.1} parent=5 // pred_fallthru
        _
      %p207 = scmp.le.s32.totalorder 1, %s17
      %p208 = scmp.lt.s32.totalorder %s17, 3
      %p209 = pnand %p207, %p208
      %p210 = pneg %p209
      // Predicated region
      $region33: #{tpu_custom_call.1} parent=5 // pred_check
        _
      $region34: #{tpu_custom_call.1} parent=5 // pred_check_branch
        %212 = sbr.rel (%p209) target = $region36
      $region35: #{tpu_custom_call.1} parent=5 // pred_region
        %s213 = ssub.s32 %s17, 1
        %s214 = sand.u32 %s44, 1
        %s215 = scalar_lea.sflag [#allocation6], %s214
        %s216 = sand.u32 %s44, 1
        %s217 = smul.addr %s216, 256
        %s218 = scalar_lea.vmem [#allocation5], %s217
        // Predicated region
        $region37: #{tpu_custom_call.1} parent=35 // pred_check
          %p219 = pneg %p57
        $region38: #{tpu_custom_call.1} parent=35 // pred_check_branch
          %221 = sbr.rel (%p219) target = $region40
        $region39: #{tpu_custom_call.1} parent=35 // pred_region
          %222 = dma.done %s215, 4096
        $region40: #{tpu_custom_call.1} parent=35 // pred_fallthru
          _
        // Predicated region
        $region41: #{tpu_custom_call.1} parent=35 // pred_check
          %p223 = pneg %p78
        $region42: #{tpu_custom_call.1} parent=35 // pred_check_branch
          %225 = sbr.rel (%p223) target = $region44
        $region43: #{tpu_custom_call.1} parent=35 // pred_region
          %226 = dma.done [#allocation9], 256
        $region44: #{tpu_custom_call.1} parent=35 // pred_fallthru
          _
        %s227 = sand.u32 %s44, 1
        %s228 = scalar_lea.sflag [#allocation6], %s227
        %s229 = sand.u32 %s44, 1
        %s230 = smul.addr %s229, 256
        %s231 = scalar_lea.vmem [#allocation5], %s230
        %p232 = pneg %p57
        %p233 = pneg %p54
        %p234 = pneg %p78
        %p235 = pneg %p75
        %p236 = pneg %p99
        %p237 = pneg %p96
        %p238 = pneg %p120
        %p239 = pneg %p117
        %p240 = pneg %p146
        %p241 = pneg %p143
        %s242 = sand.u32 %s133, 1
        %s243 = scalar_lea.sflag [#allocation7], %s242
        %s244 = sand.u32 %s133, 1
        %s245 = smul.addr %s244, 16
        %s246 = scalar_lea.vmem [#allocation10], %s245
        %s247 = smul.u32 32, %s27
        %p248 = scmp.eq.s32.totalorder %s27, 0
        // Predicated region
        $region45: #{tpu_custom_call.1} parent=35 // pred_check
          %p249 = pneg %p248
        $region46: #{tpu_custom_call.1} parent=35 // pred_check_branch
          %251 = sbr.rel (%p249) target = $region48
        $region47: #{tpu_custom_call.1} parent=35 // pred_region
          %vm252 = vcmask 7168
          %253 = vst.msk [vmem:[#allocation2] sm:$0xff] %vm252, -inf
          %254 = vst.msk [vmem:[#allocation2 + $0x8] sm:$0xff] %vm252, -inf
          %255 = vst.msk [vmem:[#allocation3] sm:$0xff] %vm252, 0.0
          %256 = vst.msk [vmem:[#allocation3 + $0x8] sm:$0xff] %vm252, 0.0
          %257 = vst [vmem:[#allocation4] sm:$0xff] 0.0
          %258 = vst [vmem:[#allocation4 + $0x8] sm:$0xff] 0.0
        $region48: #{tpu_custom_call.1} parent=35 // pred_fallthru
          _
        %v259 = vld [vmem:[%s218] sm:$0xff]
        %v260 = vld [vmem:[%s218 + $0x8] sm:$0xff]
        %v261 = vld [vmem:[%s218 + $0x10] sm:$0xff]
        %v262 = vld [vmem:[%s218 + $0x18] sm:$0xff]
        %v263 = vld [vmem:[%s218 + $0x20] sm:$0xff]
        %v264 = vld [vmem:[%s218 + $0x28] sm:$0xff]
        %v265 = vld [vmem:[%s218 + $0x30] sm:$0xff]
        %v266 = vld [vmem:[%s218 + $0x38] sm:$0xff]
        %v267 = vld [vmem:[%s218 + $0x40] sm:$0xff]
        %v268 = vld [vmem:[%s218 + $0x48] sm:$0xff]
        %v269 = vld [vmem:[%s218 + $0x50] sm:$0xff]
        %v270 = vld [vmem:[%s218 + $0x58] sm:$0xff]
        %v271 = vld [vmem:[%s218 + $0x60] sm:$0xff]
        %v272 = vld [vmem:[%s218 + $0x68] sm:$0xff]
        %v273 = vld [vmem:[%s218 + $0x70] sm:$0xff]
        %v274 = vld [vmem:[%s218 + $0x78] sm:$0xff]
        %v275 = vld [vmem:[%s218 + $0x80] sm:$0xff]
        %v276 = vld [vmem:[%s218 + $0x88] sm:$0xff]
        %v277 = vld [vmem:[%s218 + $0x90] sm:$0xff]
        %v278 = vld [vmem:[%s218 + $0x98] sm:$0xff]
        %v279 = vld [vmem:[%s218 + $0xa0] sm:$0xff]
        %v280 = vld [vmem:[%s218 + $0xa8] sm:$0xff]
        %v281 = vld [vmem:[%s218 + $0xb0] sm:$0xff]
        %v282 = vld [vmem:[%s218 + $0xb8] sm:$0xff]
        %v283 = vld [vmem:[%s218 + $0xc0] sm:$0xff]
        %v284 = vld [vmem:[%s218 + $0xc8] sm:$0xff]
        %v285 = vld [vmem:[%s218 + $0xd0] sm:$0xff]
        %v286 = vld [vmem:[%s218 + $0xd8] sm:$0xff]
        %v287 = vld [vmem:[%s218 + $0xe0] sm:$0xff]
        %v288 = vld [vmem:[%s218 + $0xe8] sm:$0xff]
        %v289 = vld [vmem:[%s218 + $0xf0] sm:$0xff]
        %v290 = vld [vmem:[%s218 + $0xf8] sm:$0xff]
        %291 = vadd.xlane.f32.xlu0 %v259
        %v292 = vpop.xlane.xlu0 %291
        %293 = vadd.xlane.f32.xlu0 %v260
        %v294 = vpop.xlane.xlu0 %293
        %295 = vadd.xlane.f32.xlu0 %v261
        %v296 = vpop.xlane.xlu0 %295
        %297 = vadd.xlane.f32.xlu0 %v262
        %v298 = vpop.xlane.xlu0 %297
        %299 = vadd.xlane.f32.xlu0 %v263
        %v300 = vpop.xlane.xlu0 %299
        %301 = vadd.xlane.f32.xlu0 %v264
        %v302 = vpop.xlane.xlu0 %301
        %303 = vadd.xlane.f32.xlu0 %v265
        %v304 = vpop.xlane.xlu0 %303
        %305 = vadd.xlane.f32.xlu0 %v266
        %v306 = vpop.xlane.xlu0 %305
        %307 = vadd.xlane.f32.xlu0 %v267
        %v308 = vpop.xlane.xlu0 %307
        %309 = vadd.xlane.f32.xlu0 %v268
        %v310 = vpop.xlane.xlu0 %309
        %311 = vadd.xlane.f32.xlu0 %v269
        %v312 = vpop.xlane.xlu0 %311
        %313 = vadd.xlane.f32.xlu0 %v270
        %v314 = vpop.xlane.xlu0 %313
        %315 = vadd.xlane.f32.xlu0 %v271
        %v316 = vpop.xlane.xlu0 %315
        %317 = vadd.xlane.f32.xlu0 %v272
        %v318 = vpop.xlane.xlu0 %317
        %319 = vadd.xlane.f32.xlu0 %v273
        %v320 = vpop.xlane.xlu0 %319
        %321 = vadd.xlane.f32.xlu0 %v274
        %v322 = vpop.xlane.xlu0 %321
        %323 = vadd.xlane.f32.xlu0 %v275
        %v324 = vpop.xlane.xlu0 %323
        %325 = vadd.xlane.f32.xlu0 %v276
        %v326 = vpop.xlane.xlu0 %325
        %327 = vadd.xlane.f32.xlu0 %v277
        %v328 = vpop.xlane.xlu0 %327
        %329 = vadd.xlane.f32.xlu0 %v278
        %v330 = vpop.xlane.xlu0 %329
        %331 = vadd.xlane.f32.xlu0 %v279
        %v332 = vpop.xlane.xlu0 %331
        %333 = vadd.xlane.f32.xlu0 %v280
        %v334 = vpop.xlane.xlu0 %333
        %335 = vadd.xlane.f32.xlu0 %v281
        %v336 = vpop.xlane.xlu0 %335
        %337 = vadd.xlane.f32.xlu0 %v282
        %v338 = vpop.xlane.xlu0 %337
        %339 = vadd.xlane.f32.xlu0 %v283
        %v340 = vpop.xlane.xlu0 %339
        %341 = vadd.xlane.f32.xlu0 %v284
        %v342 = vpop.xlane.xlu0 %341
        %343 = vadd.xlane.f32.xlu0 %v285
        %v344 = vpop.xlane.xlu0 %343
        %345 = vadd.xlane.f32.xlu0 %v286
        %v346 = vpop.xlane.xlu0 %345
        %347 = vadd.xlane.f32.xlu0 %v287
        %v348 = vpop.xlane.xlu0 %347
        %349 = vadd.xlane.f32.xlu0 %v288
        %v350 = vpop.xlane.xlu0 %349
        %351 = vadd.xlane.f32.xlu0 %v289
        %v352 = vpop.xlane.xlu0 %351
        %353 = vadd.xlane.f32.xlu0 %v290
        %v354 = vpop.xlane.xlu0 %353
        %v355 = vrcp.pop 128.0
        %v356 = vmul.f32 %v292, %v355
        %v357 = vmul.f32 %v294, %v355
        %v358 = vmul.f32 %v296, %v355
        %v359 = vmul.f32 %v298, %v355
        %v360 = vmul.f32 %v300, %v355
        %v361 = vmul.f32 %v302, %v355
        %v362 = vmul.f32 %v304, %v355
        %v363 = vmul.f32 %v306, %v355
        %v364 = vmul.f32 %v308, %v355
        %v365 = vmul.f32 %v310, %v355
        %v366 = vmul.f32 %v312, %v355
        %v367 = vmul.f32 %v314, %v355
        %v368 = vmul.f32 %v316, %v355
        %v369 = vmul.f32 %v318, %v355
        %v370 = vmul.f32 %v320, %v355
        %v371 = vmul.f32 %v322, %v355
        %v372 = vmul.f32 %v324, %v355
        %v373 = vmul.f32 %v326, %v355
        %v374 = vmul.f32 %v328, %v355
        %v375 = vmul.f32 %v330, %v355
        %v376 = vmul.f32 %v332, %v355
        %v377 = vmul.f32 %v334, %v355
        %v378 = vmul.f32 %v336, %v355
        %v379 = vmul.f32 %v338, %v355
        %v380 = vmul.f32 %v340, %v355
        %v381 = vmul.f32 %v342, %v355
        %v382 = vmul.f32 %v344, %v355
        %v383 = vmul.f32 %v346, %v355
        %v384 = vmul.f32 %v348, %v355
        %v385 = vmul.f32 %v350, %v355
        %v386 = vmul.f32 %v352, %v355
        %v387 = vmul.f32 %v354, %v355
        %v388 = vsub.f32 %v259, %v356
        %v389 = vsub.f32 %v260, %v357
        %v390 = vsub.f32 %v261, %v358
        %v391 = vsub.f32 %v262, %v359
        %v392 = vsub.f32 %v263, %v360
        %v393 = vsub.f32 %v264, %v361
        %v394 = vsub.f32 %v265, %v362
        %v395 = vsub.f32 %v266, %v363
        %v396 = vsub.f32 %v267, %v364
        %v397 = vsub.f32 %v268, %v365
        %v398 = vsub.f32 %v269, %v366
        %v399 = vsub.f32 %v270, %v367
        %v400 = vsub.f32 %v271, %v368
        %v401 = vsub.f32 %v272, %v369
        %v402 = vsub.f32 %v273, %v370
        %v403 = vsub.f32 %v274, %v371
        %v404 = vsub.f32 %v275, %v372
        %v405 = vsub.f32 %v276, %v373
        %v406 = vsub.f32 %v277, %v374
        %v407 = vsub.f32 %v278, %v375
        %v408 = vsub.f32 %v279, %v376
        %v409 = vsub.f32 %v280, %v377
        %v410 = vsub.f32 %v281, %v378
        %v411 = vsub.f32 %v282, %v379
        %v412 = vsub.f32 %v283, %v380
        %v413 = vsub.f32 %v284, %v381
        %v414 = vsub.f32 %v285, %v382
        %v415 = vsub.f32 %v286, %v383
        %v416 = vsub.f32 %v287, %v384
        %v417 = vsub.f32 %v288, %v385
        %v418 = vsub.f32 %v289, %v386
        %v419 = vsub.f32 %v290, %v387
        %v420 = vmul.f32 %v388, %v388
        %v421 = vmul.f32 %v389, %v389
        %v422 = vmul.f32 %v390, %v390
        %v423 = vmul.f32 %v391, %v391
        %v424 = vmul.f32 %v392, %v392
        %v425 = vmul.f32 %v393, %v393
        %v426 = vmul.f32 %v394, %v394
        %v427 = vmul.f32 %v395, %v395
        %v428 = vmul.f32 %v396, %v396
        %v429 = vmul.f32 %v397, %v397
        %v430 = vmul.f32 %v398, %v398
        %v431 = vmul.f32 %v399, %v399
        %v432 = vmul.f32 %v400, %v400
        %v433 = vmul.f32 %v401, %v401
        %v434 = vmul.f32 %v402, %v402
        %v435 = vmul.f32 %v403, %v403
        %v436 = vmul.f32 %v404, %v404
        %v437 = vmul.f32 %v405, %v405
        %v438 = vmul.f32 %v406, %v406
        %v439 = vmul.f32 %v407, %v407
        %v440 = vmul.f32 %v408, %v408
        %v441 = vmul.f32 %v409, %v409
        %v442 = vmul.f32 %v410, %v410
        %v443 = vmul.f32 %v411, %v411
        %v444 = vmul.f32 %v412, %v412
        %v445 = vmul.f32 %v413, %v413
        %v446 = vmul.f32 %v414, %v414
        %v447 = vmul.f32 %v415, %v415
        %v448 = vmul.f32 %v416, %v416
        %v449 = vmul.f32 %v417, %v417
        %v450 = vmul.f32 %v418, %v418
        %v451 = vmul.f32 %v419, %v419
        %452 = vadd.xlane.f32.xlu0 %v420
        %v453 = vpop.xlane.xlu0 %452
        %454 = vadd.xlane.f32.xlu0 %v421
        %v455 = vpop.xlane.xlu0 %454
        %456 = vadd.xlane.f32.xlu0 %v422
        %v457 = vpop.xlane.xlu0 %456
        %458 = vadd.xlane.f32.xlu0 %v423
        %v459 = vpop.xlane.xlu0 %458
        %460 = vadd.xlane.f32.xlu0 %v424
        %v461 = vpop.xlane.xlu0 %460
        %462 = vadd.xlane.f32.xlu0 %v425
        %v463 = vpop.xlane.xlu0 %462
        %464 = vadd.xlane.f32.xlu0 %v426
        %v465 = vpop.xlane.xlu0 %464
        %466 = vadd.xlane.f32.xlu0 %v427
        %v467 = vpop.xlane.xlu0 %466
        %468 = vadd.xlane.f32.xlu0 %v428
        %v469 = vpop.xlane.xlu0 %468
        %470 = vadd.xlane.f32.xlu0 %v429
        %v471 = vpop.xlane.xlu0 %470
        %472 = vadd.xlane.f32.xlu0 %v430
        %v473 = vpop.xlane.xlu0 %472
        %474 = vadd.xlane.f32.xlu0 %v431
        %v475 = vpop.xlane.xlu0 %474
        %476 = vadd.xlane.f32.xlu0 %v432
        %v477 = vpop.xlane.xlu0 %476
        %478 = vadd.xlane.f32.xlu0 %v433
        %v479 = vpop.xlane.xlu0 %478
        %480 = vadd.xlane.f32.xlu0 %v434
        %v481 = vpop.xlane.xlu0 %480
        %482 = vadd.xlane.f32.xlu0 %v435
        %v483 = vpop.xlane.xlu0 %482
        %484 = vadd.xlane.f32.xlu0 %v436
        %v485 = vpop.xlane.xlu0 %484
        %486 = vadd.xlane.f32.xlu0 %v437
        %v487 = vpop.xlane.xlu0 %486
        %488 = vadd.xlane.f32.xlu0 %v438
        %v489 = vpop.xlane.xlu0 %488
        %490 = vadd.xlane.f32.xlu0 %v439
        %v491 = vpop.xlane.xlu0 %490
        %492 = vadd.xlane.f32.xlu0 %v440
        %v493 = vpop.xlane.xlu0 %492
        %494 = vadd.xlane.f32.xlu0 %v441
        %v495 = vpop.xlane.xlu0 %494
        %496 = vadd.xlane.f32.xlu0 %v442
        %v497 = vpop.xlane.xlu0 %496
        %498 = vadd.xlane.f32.xlu0 %v443
        %v499 = vpop.xlane.xlu0 %498
        %500 = vadd.xlane.f32.xlu0 %v444
        %v501 = vpop.xlane.xlu0 %500
        %502 = vadd.xlane.f32.xlu0 %v445
        %v503 = vpop.xlane.xlu0 %502
        %504 = vadd.xlane.f32.xlu0 %v446
        %v505 = vpop.xlane.xlu0 %504
        %506 = vadd.xlane.f32.xlu0 %v447
        %v507 = vpop.xlane.xlu0 %506
        %508 = vadd.xlane.f32.xlu0 %v448
        %v509 = vpop.xlane.xlu0 %508
        %510 = vadd.xlane.f32.xlu0 %v449
        %v511 = vpop.xlane.xlu0 %510
        %512 = vadd.xlane.f32.xlu0 %v450
        %v513 = vpop.xlane.xlu0 %512
        %514 = vadd.xlane.f32.xlu0 %v451
        %v515 = vpop.xlane.xlu0 %514
        %v516 = vmul.f32 %v453, %v355
        %v517 = vmul.f32 %v455, %v355
        %v518 = vmul.f32 %v457, %v355
        %v519 = vmul.f32 %v459, %v355
        %v520 = vmul.f32 %v461, %v355
        %v521 = vmul.f32 %v463, %v355
        %v522 = vmul.f32 %v465, %v355
        %v523 = vmul.f32 %v467, %v355
        %v524 = vmul.f32 %v469, %v355
        %v525 = vmul.f32 %v471, %v355
        %v526 = vmul.f32 %v473, %v355
        %v527 = vmul.f32 %v475, %v355
        %v528 = vmul.f32 %v477, %v355
        %v529 = vmul.f32 %v479, %v355
        %v530 = vmul.f32 %v481, %v355
        %v531 = vmul.f32 %v483, %v355
        %v532 = vmul.f32 %v485, %v355
        %v533 = vmul.f32 %v487, %v355
        %v534 = vmul.f32 %v489, %v355
        %v535 = vmul.f32 %v491, %v355
        %v536 = vmul.f32 %v493, %v355
        %v537 = vmul.f32 %v495, %v355
        %v538 = vmul.f32 %v497, %v355
        %v539 = vmul.f32 %v499, %v355
        %v540 = vmul.f32 %v501, %v355
        %v541 = vmul.f32 %v503, %v355
        %v542 = vmul.f32 %v505, %v355
        %v543 = vmul.f32 %v507, %v355
        %v544 = vmul.f32 %v509, %v355
        %v545 = vmul.f32 %v511, %v355
        %v546 = vmul.f32 %v513, %v355
        %v547 = vmul.f32 %v515, %v355
        %v548 = vadd.f32 %v516, 1e-05
        %v549 = vadd.f32 %v517, 1e-05
        %v550 = vadd.f32 %v518, 1e-05
        %v551 = vadd.f32 %v519, 1e-05
        %v552 = vadd.f32 %v520, 1e-05
        %v553 = vadd.f32 %v521, 1e-05
        %v554 = vadd.f32 %v522, 1e-05
        %v555 = vadd.f32 %v523, 1e-05
        %v556 = vadd.f32 %v524, 1e-05
        %v557 = vadd.f32 %v525, 1e-05
        %v558 = vadd.f32 %v526, 1e-05
        %v559 = vadd.f32 %v527, 1e-05
        %v560 = vadd.f32 %v528, 1e-05
        %v561 = vadd.f32 %v529, 1e-05
        %v562 = vadd.f32 %v530, 1e-05
        %v563 = vadd.f32 %v531, 1e-05
        %v564 = vadd.f32 %v532, 1e-05
        %v565 = vadd.f32 %v533, 1e-05
        %v566 = vadd.f32 %v534, 1e-05
        %v567 = vadd.f32 %v535, 1e-05
        %v568 = vadd.f32 %v536, 1e-05
        %v569 = vadd.f32 %v537, 1e-05
        %v570 = vadd.f32 %v538, 1e-05
        %v571 = vadd.f32 %v539, 1e-05
        %v572 = vadd.f32 %v540, 1e-05
        %v573 = vadd.f32 %v541, 1e-05
        %v574 = vadd.f32 %v542, 1e-05
        %v575 = vadd.f32 %v543, 1e-05
        %v576 = vadd.f32 %v544, 1e-05
        %v577 = vadd.f32 %v545, 1e-05
        %v578 = vadd.f32 %v546, 1e-05
        %v579 = vadd.f32 %v547, 1e-05
        %v580 = vrsqrt.pop %v548
        %v581 = vrsqrt.pop %v549
        %v582 = vrsqrt.pop %v550
        %v583 = vrsqrt.pop %v551
        %v584 = vrsqrt.pop %v552
        %v585 = vrsqrt.pop %v553
        %v586 = vrsqrt.pop %v554
        %v587 = vrsqrt.pop %v555
        %v588 = vrsqrt.pop %v556
        %v589 = vrsqrt.pop %v557
        %v590 = vrsqrt.pop %v558
        %v591 = vrsqrt.pop %v559
        %v592 = vrsqrt.pop %v560
        %v593 = vrsqrt.pop %v561
        %v594 = vrsqrt.pop %v562
        %v595 = vrsqrt.pop %v563
        %v596 = vrsqrt.pop %v564
        %v597 = vrsqrt.pop %v565
        %v598 = vrsqrt.pop %v566
        %v599 = vrsqrt.pop %v567
        %v600 = vrsqrt.pop %v568
        %v601 = vrsqrt.pop %v569
        %v602 = vrsqrt.pop %v570
        %v603 = vrsqrt.pop %v571
        %v604 = vrsqrt.pop %v572
        %v605 = vrsqrt.pop %v573
        %v606 = vrsqrt.pop %v574
        %v607 = vrsqrt.pop %v575
        %v608 = vrsqrt.pop %v576
        %v609 = vrsqrt.pop %v577
        %v610 = vrsqrt.pop %v578
        %v611 = vrsqrt.pop %v579
        %v612 = vmul.f32 %v388, %v580
        %v613 = vmul.f32 %v389, %v581
        %v614 = vmul.f32 %v390, %v582
        %v615 = vmul.f32 %v391, %v583
        %v616 = vmul.f32 %v392, %v584
        %v617 = vmul.f32 %v393, %v585
        %v618 = vmul.f32 %v394, %v586
        %v619 = vmul.f32 %v395, %v587
        %v620 = vmul.f32 %v396, %v588
        %v621 = vmul.f32 %v397, %v589
        %v622 = vmul.f32 %v398, %v590
        %v623 = vmul.f32 %v399, %v591
        %v624 = vmul.f32 %v400, %v592
        %v625 = vmul.f32 %v401, %v593
        %v626 = vmul.f32 %v402, %v594
        %v627 = vmul.f32 %v403, %v595
        %v628 = vmul.f32 %v404, %v596
        %v629 = vmul.f32 %v405, %v597
        %v630 = vmul.f32 %v406, %v598
        %v631 = vmul.f32 %v407, %v599
        %v632 = vmul.f32 %v408, %v600
        %v633 = vmul.f32 %v409, %v601
        %v634 = vmul.f32 %v410, %v602
        %v635 = vmul.f32 %v411, %v603
        %v636 = vmul.f32 %v412, %v604
        %v637 = vmul.f32 %v413, %v605
        %v638 = vmul.f32 %v414, %v606
        %v639 = vmul.f32 %v415, %v607
        %v640 = vmul.f32 %v416, %v608
        %v641 = vmul.f32 %v417, %v609
        %v642 = vmul.f32 %v418, %v610
        %v643 = vmul.f32 %v419, %v611
        %v644 = vld [vmem:[%s2] sm:$0x1]
        %v646 = vlaneseq
        %v647 = vshrl.u32 %v646, 7
        %v648 = vsub.s32 0, %v647
        %v649 = vrot.slane %v644, %v648
        %v651 = vmul.f32 %v612, %v649
        %v652 = vmul.f32 %v613, %v649
        %v653 = vmul.f32 %v614, %v649
        %v654 = vmul.f32 %v615, %v649
        %v655 = vmul.f32 %v616, %v649
        %v656 = vmul.f32 %v617, %v649
        %v657 = vmul.f32 %v618, %v649
        %v658 = vmul.f32 %v619, %v649
        %v659 = vmul.f32 %v620, %v649
        %v660 = vmul.f32 %v621, %v649
        %v661 = vmul.f32 %v622, %v649
        %v662 = vmul.f32 %v623, %v649
        %v663 = vmul.f32 %v624, %v649
        %v664 = vmul.f32 %v625, %v649
        %v665 = vmul.f32 %v626, %v649
        %v666 = vmul.f32 %v627, %v649
        %v667 = vmul.f32 %v628, %v649
        %v668 = vmul.f32 %v629, %v649
        %v669 = vmul.f32 %v630, %v649
        %v670 = vmul.f32 %v631, %v649
        %v671 = vmul.f32 %v632, %v649
        %v672 = vmul.f32 %v633, %v649
        %v673 = vmul.f32 %v634, %v649
        %v674 = vmul.f32 %v635, %v649
        %v675 = vmul.f32 %v636, %v649
        %v676 = vmul.f32 %v637, %v649
        %v677 = vmul.f32 %v638, %v649
        %v678 = vmul.f32 %v639, %v649
        %v679 = vmul.f32 %v640, %v649
        %v680 = vmul.f32 %v641, %v649
        %v681 = vmul.f32 %v642, %v649
        %v682 = vmul.f32 %v643, %v649
        %v683 = vld [vmem:[%s3] sm:$0x1]
        %v685 = vlaneseq
        %v686 = vshrl.u32 %v685, 7
        %v687 = vsub.s32 0, %v686
        %v688 = vrot.slane %v683, %v687
        %v690 = vadd.f32 %v651, %v688
        %v691 = vadd.f32 %v652, %v688
        %v692 = vadd.f32 %v653, %v688
        %v693 = vadd.f32 %v654, %v688
        %v694 = vadd.f32 %v655, %v688
        %v695 = vadd.f32 %v656, %v688
        %v696 = vadd.f32 %v657, %v688
        %v697 = vadd.f32 %v658, %v688
        %v698 = vadd.f32 %v659, %v688
        %v699 = vadd.f32 %v660, %v688
        %v700 = vadd.f32 %v661, %v688
        %v701 = vadd.f32 %v662, %v688
        %v702 = vadd.f32 %v663, %v688
        %v703 = vadd.f32 %v664, %v688
        %v704 = vadd.f32 %v665, %v688
        %v705 = vadd.f32 %v666, %v688
        %v706 = vadd.f32 %v667, %v688
        %v707 = vadd.f32 %v668, %v688
        %v708 = vadd.f32 %v669, %v688
        %v709 = vadd.f32 %v670, %v688
        %v710 = vadd.f32 %v671, %v688
        %v711 = vadd.f32 %v672, %v688
        %v712 = vadd.f32 %v673, %v688
        %v713 = vadd.f32 %v674, %v688
        %v714 = vadd.f32 %v675, %v688
        %v715 = vadd.f32 %v676, %v688
        %v716 = vadd.f32 %v677, %v688
        %v717 = vadd.f32 %v678, %v688
        %v718 = vadd.f32 %v679, %v688
        %v719 = vadd.f32 %v680, %v688
        %v720 = vadd.f32 %v681, %v688
        %v721 = vadd.f32 %v682, %v688
        %v722 = vld [vmem:[#allocation8] sm:$0xff]
        %v723 = vld [vmem:[#allocation8 + $0x8] sm:$0xff]
        %724 = vmatprep.subr.mxu0 0.0
        %725 = vmatpush1.xpose.msra.mxu0 %v690
        %726 = vmatprep.subr.mxu0 0.0
        %727 = vmatpush1.xpose.msra.mxu0 %v691
        %728 = vmatprep.subr.mxu0 0.0
        %729 = vmatpush1.xpose.msra.mxu0 %v692
        %730 = vmatprep.subr.mxu0 0.0
        %731 = vmatpush1.xpose.msra.mxu0 %v693
        %732 = vmatprep.subr.mxu0 0.0
        %733 = vmatpush1.xpose.msra.mxu0 %v694
        %734 = vmatprep.subr.mxu0 0.0
        %735 = vmatpush1.xpose.msra.mxu0 %v695
        %736 = vmatprep.subr.mxu0 0.0
        %737 = vmatpush1.xpose.msra.mxu0 %v696
        %738 = vmatprep.subr.mxu0 0.0
        %739 = vmatpush1.xpose.msra.mxu0 %v697
        %740 = vmatprep.subr.mxu0 0.0
        %741 = vmatpush1.xpose.msra.mxu0 %v698
        %742 = vmatprep.subr.mxu0 0.0
        %743 = vmatpush1.xpose.msra.mxu0 %v699
        %744 = vmatprep.subr.mxu0 0.0
        %745 = vmatpush1.xpose.msra.mxu0 %v700
        %746 = vmatprep.subr.mxu0 0.0
        %747 = vmatpush1.xpose.msra.mxu0 %v701
        %748 = vmatprep.subr.mxu0 0.0
        %749 = vmatpush1.xpose.msra.mxu0 %v702
        %750 = vmatprep.subr.mxu0 0.0
        %751 = vmatpush1.xpose.msra.mxu0 %v703
        %752 = vmatprep.subr.mxu0 0.0
        %753 = vmatpush1.xpose.msra.mxu0 %v704
        %754 = vmatprep.subr.mxu0 0.0
        %755 = vmatpush1.xpose.msra.mxu0 %v705
        %756 = vmatprep.subr.mxu0 0.0
        %757 = vmatpush1.xpose.msra.mxu0 %v706
        %758 = vmatprep.subr.mxu0 0.0
        %759 = vmatpush1.xpose.msra.mxu0 %v707
        %760 = vmatprep.subr.mxu0 0.0
        %761 = vmatpush1.xpose.msra.mxu0 %v708
        %762 = vmatprep.subr.mxu0 0.0
        %763 = vmatpush1.xpose.msra.mxu0 %v709
        %764 = vmatprep.subr.mxu0 0.0
        %765 = vmatpush1.xpose.msra.mxu0 %v710
        %766 = vmatprep.subr.mxu0 0.0
        %767 = vmatpush1.xpose.msra.mxu0 %v711
        %768 = vmatprep.subr.mxu0 0.0
        %769 = vmatpush1.xpose.msra.mxu0 %v712
        %770 = vmatprep.subr.mxu0 0.0
        %771 = vmatpush1.xpose.msra.mxu0 %v713
        %772 = vmatprep.subr.mxu0 0.0
        %773 = vmatpush1.xpose.msra.mxu0 %v714
        %774 = vmatprep.subr.mxu0 0.0
        %775 = vmatpush1.xpose.msra.mxu0 %v715
        %776 = vmatprep.subr.mxu0 0.0
        %777 = vmatpush1.xpose.msra.mxu0 %v716
        %778 = vmatprep.subr.mxu0 0.0
        %779 = vmatpush1.xpose.msra.mxu0 %v717
        %780 = vmatprep.subr.mxu0 0.0
        %781 = vmatpush1.xpose.msra.mxu0 %v718
        %782 = vmatprep.subr.mxu0 0.0
        %783 = vmatpush1.xpose.msra.mxu0 %v719
        %784 = vmatprep.subr.mxu0 0.0
        %785 = vmatpush1.xpose.msra.mxu0 %v720
        %786 = vmatprep.subr.mxu0 0.0
        %787 = vmatpush1.xpose.msra.mxu0 %v721
        %788 = vmatprep.mubr.f32.mxu0 0.0
        %789 = vmatmul.mubr.f32.gmra.mrb[0].mxu0 %v722
        %v790 = vpop.f32.mrb[0].mxu0
        %v791 = vadd.f32 0.0, %v790
        %v792 = vpop.f32.mrb[0].mxu0
        %v793 = vadd.f32 0.0, %v792
        %794 = vmatprep.mubr.f32.mxu0 0.0
        %795 = vmatmul.mubr.f32.gmra.mrb[0].mxu0 %v723
        %v796 = vpop.f32.mrb[0].mxu0
        %v797 = vadd.f32 0.0, %v796
        %v798 = vpop.f32.mrb[0].mxu0
        %v799 = vadd.f32 0.0, %v798
        %800 = vdwg.mxu0
        %v801 = vmul.f32 %v791, 0.088388346
        %v802 = vmul.f32 %v793, 0.088388346
        %v803 = vmul.f32 %v797, 0.088388346
        %v804 = vmul.f32 %v799, 0.088388346
        %v805 = vld [vmem:[#allocation2] sm:$0xff]
        %v806 = vld [vmem:[#allocation2 + $0x8] sm:$0xff]
        %v807 = vmax.f32 %v801, %v802
        %808 = vmax.xlane.f32.xlu0 %v807
        %v809 = vpop.xlane.xlu0 %808
        %v810 = vmax.f32 %v803, %v804
        %811 = vmax.xlane.f32.xlu0 %v810
        %v812 = vpop.xlane.xlu0 %811
        %v813 = vmax.f32 %v805, %v809
        %v814 = vmax.f32 %v806, %v812
        %v815 = vsub.f32 %v805, %v813
        %v816 = vsub.f32 %v806, %v814
        %v817 = vmul.f32 %v815, 1.442695
        %v818 = vpow.pop %v817
        %v819 = vmul.f32 %v816, 1.442695
        %v820 = vpow.pop %v819
        %822 = vset.pattern.permute.xlu0 0
        %823 = vperm.xlu0 %822, %v813
        %v824 = vpop.permute.xlu0 %823
        %827 = vset.pattern.permute.xlu0 0
        %828 = vperm.xlu0 %827, %v814
        %v829 = vpop.permute.xlu0 %828
        %v831 = vsub.f32 %v801, %v824
        %v832 = vsub.f32 %v802, %v824
        %v833 = vsub.f32 %v803, %v829
        %v834 = vsub.f32 %v804, %v829
        %v835 = vmul.f32 %v831, 1.442695
        %v836 = vpow.pop %v835
        %v837 = vmul.f32 %v832, 1.442695
        %v838 = vpow.pop %v837
        %v839 = vmul.f32 %v833, 1.442695
        %v840 = vpow.pop %v839
        %v841 = vmul.f32 %v834, 1.442695
        %v842 = vpow.pop %v841
        %v843 = vld [vmem:[#allocation3] sm:$0xff]
        %v844 = vld [vmem:[#allocation3 + $0x8] sm:$0xff]
        %v845 = vmul.f32 %v818, %v843
        %v846 = vmul.f32 %v820, %v844
        %v847 = vadd.f32 %v836, %v838
        %848 = vadd.xlane.f32.xlu0 %v847
        %v849 = vpop.xlane.xlu0 %848
        %v850 = vadd.f32 %v840, %v842
        %851 = vadd.xlane.f32.xlu0 %v850
        %v852 = vpop.xlane.xlu0 %851
        %v853 = vadd.f32 %v845, %v849
        %v854 = vadd.f32 %v846, %v852
        %vm855 = vcmask 7168
        %856 = vst.msk [vmem:[#allocation3] sm:$0xff] %vm855, %v853
        %857 = vst.msk [vmem:[#allocation3 + $0x8] sm:$0xff] %vm855, %v854
        %v858 = vld [vmem:[#allocation4] sm:$0xff]
        %v859 = vld [vmem:[#allocation4 + $0x8] sm:$0xff]
        %861 = vset.pattern.permute.xlu0 0
        %862 = vperm.xlu0 %861, %v818
        %v863 = vpop.permute.xlu0 %862
        %866 = vset.pattern.permute.xlu0 0
        %867 = vperm.xlu0 %866, %v820
        %v868 = vpop.permute.xlu0 %867
        %v870 = vmul.f32 %v863, %v858
        %v871 = vmul.f32 %v868, %v859
        %872 = vmatprep.subr.mxu0 0.0
        %873 = vmatpush1.msra.mxu0 %v690
        %874 = vmatprep.subr.mxu0 0.0
        %875 = vmatpush1.msra.mxu0 %v691
        %876 = vmatprep.subr.mxu0 0.0
        %877 = vmatpush1.msra.mxu0 %v692
        %878 = vmatprep.subr.mxu0 0.0
        %879 = vmatpush1.msra.mxu0 %v693
        %880 = vmatprep.subr.mxu0 0.0
        %881 = vmatpush1.msra.mxu0 %v694
        %882 = vmatprep.subr.mxu0 0.0
        %883 = vmatpush1.msra.mxu0 %v695
        %884 = vmatprep.subr.mxu0 0.0
        %885 = vmatpush1.msra.mxu0 %v696
        %886 = vmatprep.subr.mxu0 0.0
        %887 = vmatpush1.msra.mxu0 %v697
        %888 = vmatprep.subr.mxu0 0.0
        %889 = vmatpush1.msra.mxu0 %v698
        %890 = vmatprep.subr.mxu0 0.0
        %891 = vmatpush1.msra.mxu0 %v699
        %892 = vmatprep.subr.mxu0 0.0
        %893 = vmatpush1.msra.mxu0 %v700
        %894 = vmatprep.subr.mxu0 0.0
        %895 = vmatpush1.msra.mxu0 %v701
        %896 = vmatprep.subr.mxu0 0.0
        %897 = vmatpush1.msra.mxu0 %v702
        %898 = vmatprep.subr.mxu0 0.0
        %899 = vmatpush1.msra.mxu0 %v703
        %900 = vmatprep.subr.mxu0 0.0
        %901 = vmatpush1.msra.mxu0 %v704
        %902 = vmatprep.subr.mxu0 0.0
        %903 = vmatpush1.msra.mxu0 %v705
        %904 = vmatprep.subr.mxu0 0.0
        %905 = vmatpush1.msra.mxu0 %v706
        %906 = vmatprep.subr.mxu0 0.0
        %907 = vmatpush1.msra.mxu0 %v707
        %908 = vmatprep.subr.mxu0 0.0
        %909 = vmatpush1.msra.mxu0 %v708
        %910 = vmatprep.subr.mxu0 0.0
        %911 = vmatpush1.msra.mxu0 %v709
        %912 = vmatprep.subr.mxu0 0.0
        %913 = vmatpush1.msra.mxu0 %v710
        %914 = vmatprep.subr.mxu0 0.0
        %915 = vmatpush1.msra.mxu0 %v711
        %916 = vmatprep.subr.mxu0 0.0
        %917 = vmatpush1.msra.mxu0 %v712
        %918 = vmatprep.subr.mxu0 0.0
        %919 = vmatpush1.msra.mxu0 %v713
        %920 = vmatprep.subr.mxu0 0.0
        %921 = vmatpush1.msra.mxu0 %v714
        %922 = vmatprep.subr.mxu0 0.0
        %923 = vmatpush1.msra.mxu0 %v715
        %924 = vmatprep.subr.mxu0 0.0
        %925 = vmatpush1.msra.mxu0 %v716
        %926 = vmatprep.subr.mxu0 0.0
        %927 = vmatpush1.msra.mxu0 %v717
        %928 = vmatprep.subr.mxu0 0.0
        %929 = vmatpush1.msra.mxu0 %v718
        %930 = vmatprep.subr.mxu0 0.0
        %931 = vmatpush1.msra.mxu0 %v719
        %932 = vmatprep.subr.mxu0 0.0
        %933 = vmatpush1.msra.mxu0 %v720
        %934 = vmatprep.subr.mxu0 0.0
        %935 = vmatpush1.msra.mxu0 %v721
        %936 = vmatprep.mubr.f32.mxu0 %v838
        %937 = vmatmul.mubr.f32.gmra.mrb[0].mxu0 %v836
        %v938 = vpop.f32.mrb[0].mxu0
        %v939 = vadd.f32 0.0, %v938
        %v940 = vpop.f32.mrb[0].mxu0
        %941 = vmatprep.mubr.f32.mxu0 %v842
        %942 = vmatmul.mubr.f32.gmra.mrb[0].mxu0 %v840
        %v943 = vpop.f32.mrb[0].mxu0
        %v944 = vadd.f32 0.0, %v943
        %v945 = vpop.f32.mrb[0].mxu0
        %946 = vdwg.mxu0
        %v947 = vadd.f32 %v870, %v939
        %v948 = vadd.f32 %v871, %v944
        %949 = vst [vmem:[#allocation4] sm:$0xff] %v947
        %950 = vst [vmem:[#allocation4 + $0x8] sm:$0xff] %v948
        %951 = vst.msk [vmem:[#allocation2] sm:$0xff] %vm855, %v813
        %952 = vst.msk [vmem:[#allocation2 + $0x8] sm:$0xff] %vm855, %v814
        // Predicated region
        $region49: #{tpu_custom_call.1} parent=35 // pred_check
          %p953 = pneg %p248
        $region50: #{tpu_custom_call.1} parent=35 // pred_check_branch
          %955 = sbr.rel (%p953) target = $region52
        $region51: #{tpu_custom_call.1} parent=35 // pred_region
          %v956 = vld [vmem:[#allocation3] sm:$0xff]
          %v957 = vld [vmem:[#allocation3 + $0x8] sm:$0xff]
          %v958 = vrcp.pop %v956
          %v959 = vrcp.pop %v957
          %v960 = vld [vmem:[#allocation4] sm:$0xff]
          %v961 = vld [vmem:[#allocation4 + $0x8] sm:$0xff]
          %963 = vset.pattern.permute.xlu0 0
          %964 = vperm.xlu0 %963, %v958
          %v965 = vpop.permute.xlu0 %964
          %968 = vset.pattern.permute.xlu0 0
          %969 = vperm.xlu0 %968, %v959
          %v970 = vpop.permute.xlu0 %969
          %v972 = vmul.f32 %v960, %v965
          %v973 = vmul.f32 %v961, %v970
          %974 = vst [vmem:[%s246] sm:$0xff] %v972
          %975 = vst [vmem:[%s246 + $0x8] sm:$0xff] %v973
        $region52: #{tpu_custom_call.1} parent=35 // pred_fallthru
          _
        %s976 = sand.u32 %s133, 1
        %s977 = scalar_lea.sflag [#allocation7], %s976
        %s978 = sand.u32 %s133, 1
        %s979 = smul.addr %s978, 16
        %s980 = scalar_lea.vmem [#allocation10], %s979
        // Predicated region
        $region53: #{tpu_custom_call.1} parent=35 // pred_check
          %p981 = pneg %p143
        $region54: #{tpu_custom_call.1} parent=35 // pred_check_branch
          %983 = sbr.rel (%p981) target = $region56
        $region55: #{tpu_custom_call.1} parent=35 // pred_region
          %s985 = ssub.s32 256, 256
          %986 = vsyncadd %s977, %s985
          %s987 = smul.addr %s26, 2
          %s988 = smul.addr %s987, 128
          %s989 = scalar_lea.hbm %s4, %s988
          %s990 = sshll.u32 %s980, 4
          %s991 = int_to_ptr.vmem [resolvable:$true] %s990
          %996 = dma.vmem_to_hbm [thread:$0]  %s991, 256, %s989, %s977, 128, 128, 8
        $region56: #{tpu_custom_call.1} parent=35 // pred_fallthru
          _
      $region36: #{tpu_custom_call.1} parent=5 // pred_fallthru
        _
      %p997 = scmp.le.s32.totalorder 2, %s17
      // Predicated region
      $region57: #{tpu_custom_call.1} parent=5 // pred_check
        %p998 = pneg %p997
      $region58: #{tpu_custom_call.1} parent=5 // pred_check_branch
        %1000 = sbr.rel (%p998) target = $region60
      $region59: #{tpu_custom_call.1} parent=5 // pred_region
        %s1001 = ssub.s32 %s17, 2
        // Predicated region
        $region61: #{tpu_custom_call.1} parent=59 // pred_check
          %p1002 = pneg %p149
        $region62: #{tpu_custom_call.1} parent=59 // pred_check_branch
          %1004 = sbr.rel (%p1002) target = $region64
        $region63: #{tpu_custom_call.1} parent=59 // pred_region
          %s1005 = sand.u32 %s134, 1
          %s1006 = scalar_lea.sflag [#allocation7], %s1005
          %s1007 = sand.u32 %s134, 1
          %s1008 = smul.addr %s1007, 16
          %s1009 = scalar_lea.vmem [#allocation10], %s1008
          %1010 = dma.done %s1006, 256
        $region64: #{tpu_custom_call.1} parent=59 // pred_fallthru
          _
      $region60: #{tpu_custom_call.1} parent=5 // pred_fallthru
        _
    $region6: #{tpu_custom_call.1} parent=1 // loop_footer
      %s21 = sadd.s32 1, %s17
    $region7: #{tpu_custom_call.1} parent=1 // loop_footer_branch
      %16 = sbr.rel target = $region3
    $region8: #{tpu_custom_call.1} parent=1 // loop_exit
      _
    %1011 = vsyncpa [#allocation6], 1
    %s1012 = scalar_lea.sflag [#allocation6], 1
    %1013 = vsyncpa %s1012, 1
    %1014 = vsyncpa [#allocation9], 1
    %1015 = vsyncpa [#allocation7], 1
    %s1016 = scalar_lea.sflag [#allocation7], 1
    %1017 = vsyncpa %s1016, 1

</llo_original>
